<compile_context>
chip_gen: v6e
topology: v6e:2x2x1
jax: 0.10.0
libtpu: 0.0.40
codegen_flags: <defaults>
</compile_context>

<pallas_src>
import functools

import jax
import jax.numpy as jnp
from jax.experimental import pallas as pl
from jax.experimental.pallas import tpu as pltpu

OUT_W = 8  # narrow lane-padded output width; q1 -> col 0, q2 -> col 1


def _round_up(x, m):
    return ((x + m - 1) // m) * m


def _cdiv(a, b):
    return (a + b - 1) // b


def _critic_kernel(obs_ref, act_ref,
                   w1o_ref, w1a_ref, b1_ref,
                   w2a_ref, b2a_ref, w2b_ref, b2b_ref,
                   w3a_ref, w3b_ref, b3_ref,
                   out_ref):
    """Fused two-head critic MLP on one batch tile.

    obs_ref: (TB, F)            act_ref: (TB, A)
    w1o_ref: (F, 2*hp)          w1a_ref: (A, 2*hp)       b1_ref: (1, 2*hp)
    w2a_ref/w2b_ref: (hp, hp)   b2a_ref/b2b_ref: (1, hp)
    w3a_ref/w3b_ref: (hp, OUT_W)                         b3_ref: (1, OUT_W)
    out_ref: (TB, OUT_W)
    """
    hp = w2a_ref.shape[0]
    wdt = w1o_ref.dtype  # f32 or bf16 (weights); accumulation always f32

    # ---- Layer 1: fused-concat matmul; tiny-K action term on the VPU ----
    acc = jnp.dot(obs_ref[...].astype(wdt), w1o_ref[...],
                  preferred_element_type=jnp.float32) + b1_ref[...]
    act = act_ref[...]
    a_dim = act.shape[1]
    if a_dim <= 8:
        # K<=8 contraction: A broadcast-FMAs on otherwise-idle VALU slots
        # instead of an almost-empty MXU pass (v5e hint, harmless elsewhere).
        w1a = w1a_ref[...]
        for j in range(a_dim):
            acc = acc + act[:, j:j + 1] * w1a[j:j + 1, :]
    else:
        acc = acc + jnp.dot(act.astype(wdt), w1a_ref[...],
                            preferred_element_type=jnp.float32)
    x = jnp.maximum(acc, 0.0)

    # ---- Layer 2: two per-head matmuls on 128-aligned halves of x ----
    xa = x[:, :hp].astype(wdt)
    xb = x[:, hp:].astype(wdt)
    ya = jnp.maximum(
        jnp.dot(xa, w2a_ref[...], preferred_element_type=jnp.float32)
        + b2a_ref[...], 0.0)
    yb = jnp.maximum(
        jnp.dot(xb, w2b_ref[...], preferred_element_type=jnp.float32)
        + b2b_ref[...], 0.0)

    # ---- Layer 3: narrow heads -> (TB, OUT_W); q1 in col 0, q2 in col 1 ----
    out_ref[...] = (
        jnp.dot(ya.astype(wdt), w3a_ref[...], preferred_element_type=jnp.float32)
        + jnp.dot(yb.astype(wdt), w3b_ref[...], preferred_element_type=jnp.float32)
        + b3_ref[...])


def fuse_critic_params(params, feature_dim, action_dim, hidden_dim,
                       use_bf16=False):
    """Fuse the two Q-heads into lane-padded weights (one-time, outside fwd).

    Input `params` layout (per head): W as (in, out), b as (1, out)
    (i.e. x @ W + b == PyTorch x @ W_pt.T + b).
    Returns (w1_obs, w1_act, b1, w2a, b2a, w2b, b2b, w3a, w3b, b3).
    Weights optionally bf16 (v6e/v7x bandwidth lever); biases stay f32.
    """
    (w1a_, b1a_, w2a_, b2a_, w3a_, b3a_,
     w1b_, b1b_, w2b_, b2b_, w3b_, b3b_) = params
    h = hidden_dim
    hp = _round_up(h, 128)      # per-head hidden width, lane aligned
    width = 2 * hp              # fused layer-1 output width
    f32 = jnp.float32

    # Layer 1: head-a -> lanes [0:hp), head-b -> lanes [hp:2hp).
    w1 = jnp.zeros((feature_dim + action_dim, width), f32)
    w1 = w1.at[:, 0:h].set(w1a_).at[:, hp:hp + h].set(w1b_)
    b1 = jnp.zeros((1, width), f32)
    b1 = b1.at[:, 0:h].set(b1a_).at[:, hp:hp + h].set(b1b_)
    w1_obs = w1[:feature_dim]
    w1_act = w1[feature_dim:]

    # Layer 2: two per-head (hp, hp) weights (no zero-filled block-diagonal).
    w2a = jnp.zeros((hp, hp), f32).at[0:h, 0:h].set(w2a_)
    w2b = jnp.zeros((hp, hp), f32).at[0:h, 0:h].set(w2b_)
    b2a = jnp.zeros((1, hp), f32).at[:, 0:h].set(b2a_)
    b2b = jnp.zeros((1, hp), f32).at[:, 0:h].set(b2b_)

    # Layer 3: q1 -> column 0 (head a), q2 -> column 1 (head b).
    w3a = jnp.zeros((hp, OUT_W), f32).at[0:h, 0:1].set(w3a_)
    w3b = jnp.zeros((hp, OUT_W), f32).at[0:h, 1:2].set(w3b_)
    b3 = jnp.zeros((1, OUT_W), f32).at[:, 0:1].set(b3a_).at[:, 1:2].set(b3b_)

    if use_bf16:
        bf16 = jnp.bfloat16
        w1_obs, w1_act = w1_obs.astype(bf16), w1_act.astype(bf16)
        w2a, w2b = w2a.astype(bf16), w2b.astype(bf16)
        w3a, w3b = w3a.astype(bf16), w3b.astype(bf16)

    return (w1_obs, w1_act, b1, w2a, b2a, w2b, b2b, w3a, w3b, b3)


@functools.partial(jax.jit, static_argnames=("tile_b",))
def critic_forward(obs, action, fused_params, tile_b=2048):
    """obs: (B, feature_dim), action: (B, action_dim) -> (q1, q2), each (B, 1)."""
    obs = obs.astype(jnp.float32)
    action = action.astype(jnp.float32)
    (w1_obs, w1_act, b1, w2a, b2a, w2b, b2b, w3a, w3b, b3) = fused_params

    B, F = obs.shape
    A = action.shape[1]
    hp = w2a.shape[0]
    width = 2 * hp

    # Adaptive batch tile: multiple of 8, capped at tile_b, and capped at
    # ceil(B/2) so large batches always produce >= 2 grid steps (both v7x TCs).
    tb = min(tile_b, _round_up(max(_cdiv(B, 2), 1), 8))
    grid = (pl.cdiv(B, tb),)  # ragged last block handled by Pallas (no jnp.pad)

    def full(shape):
        # Resident weights: full-array block, always block (0, 0).
        return pl.BlockSpec(shape, lambda i: (0, 0))

    weights = (w1_obs, w1_act, b1, w2a, b2a, w2b, b2b, w3a, w3b, b3)
    weight_bytes = sum(int(w.size) * w.dtype.itemsize for w in weights)

    # Accurate-ish cost hint so XLA can schedule this few-microsecond call.
    flops = 2 * B * ((F + A) * width + 2 * hp * hp + 2 * hp * OUT_W)
    bytes_accessed = B * (F + A) * 4 + weight_bytes + B * OUT_W * 4
    cost = pl.CostEstimate(flops=flops, transcendentals=0,
                           bytes_accessed=bytes_accessed)

    # Rough VMEM budget: double-buffered tiles + resident weights + activations.
    tile_io_bytes = tb * (F + A) * 4 + tb * OUT_W * 4
    act_bytes = tb * width * 4
    vmem_est = 2 * (weight_bytes + tile_io_bytes) + 3 * act_bytes + (2 << 20)
    vmem_limit = int(min(max(vmem_est, 16 * 1024 * 1024), 48 * 1024 * 1024))

    out = pl.pallas_call(
        _critic_kernel,
        out_shape=jax.ShapeDtypeStruct((B, OUT_W), jnp.float32),
        grid=grid,
        in_specs=[
            pl.BlockSpec((tb, F), lambda i: (i, 0)),      # obs tile
            pl.BlockSpec((tb, A), lambda i: (i, 0)),      # action tile
            full((F, width)),                             # w1_obs
            full((A, width)),                             # w1_act
            full((1, width)),                             # b1
            full((hp, hp)),                               # w2a
            full((1, hp)),                                # b2a
            full((hp, hp)),                               # w2b
            full((1, hp)),                                # b2b
            full((hp, OUT_W)),                            # w3a
            full((hp, OUT_W)),                            # w3b
            full((1, OUT_W)),                             # b3
        ],
        out_specs=pl.BlockSpec((tb, OUT_W), lambda i: (i, 0)),
        compiler_params=pltpu.CompilerParams(
            dimension_semantics=("parallel",),
            vmem_limit_bytes=vmem_limit),
        cost_estimate=cost,
    )(obs, action, *weights)

    q1 = out[:, 0:1]
    q2 = out[:, 1:2]
    return q1, q2


def init_params(key, in_dim, hidden_dim):
    """Deterministic synthetic parameters.  Weight layout: (in, out);
    bias layout: (1, out)."""
    def linear(k, din, dout):
        kw, kb = jax.random.split(k)
        scale = 1.0 / jnp.sqrt(jnp.float32(din))
        w = jax.random.uniform(kw, (din, dout), jnp.float32, -scale, scale)
        b = jax.random.uniform(kb, (1, dout), jnp.float32, -scale, scale)
        return w, b

    keys = jax.random.split(key, 6)
    w1a, b1a = linear(keys[0], in_dim, hidden_dim)
    w2a, b2a = linear(keys[1], hidden_dim, hidden_dim)
    w3a, b3a = linear(keys[2], hidden_dim, 1)
    w1b, b1b = linear(keys[3], in_dim, hidden_dim)
    w2b, b2b = linear(keys[4], hidden_dim, hidden_dim)
    w3b, b3b = linear(keys[5], hidden_dim, 1)
    return (w1a, b1a, w2a, b2a, w3a, b3a,
            w1b, b1b, w2b, b2b, w3b, b3b)


def _reference(obs, action, params):
    """Pure-JAX reference (unfused, per-head) for correctness check."""
    (w1a, b1a, w2a, b2a, w3a, b3a,
     w1b, b1b, w2b, b2b, w3b, b3b) = params
    h = jnp.concatenate([obs, action], axis=-1)

    def mlp(w1, b1, w2, b2, w3, b3):
        x = jnp.maximum(h @ w1 + b1, 0.0)
        x = jnp.maximum(x @ w2 + b2, 0.0)
        return x @ w3 + b3

    return (mlp(w1a, b1a, w2a, b2a, w3a, b3a),
            mlp(w1b, b1b, w2b, b2b, w3b, b3b))


if __name__ == "__main__":
    # Small, module-consistent shapes (obs here is the trunk output feature).
    batch = 8
    feature_dim = 32      # -> obs: (B, feature_dim)
    action_dim = 4        # action_shape = (4,)
    hidden_dim = 32
    in_dim = feature_dim + action_dim

    key = jax.random.PRNGKey(0)
    k_obs, k_act, k_par = jax.random.split(key, 3)
    obs = jax.random.normal(k_obs, (batch, feature_dim), jnp.float32)
    action = jax.random.normal(k_act, (batch, action_dim), jnp.float32)
    params = init_params(k_par, in_dim, hidden_dim)

    r1, r2 = _reference(obs, action, params)

    # --- f32 path (strict tolerance) ---
    fused = fuse_critic_params(params, feature_dim, action_dim, hidden_dim)
    q1, q2 = critic_forward(obs, action, fused)
    q1 = jax.block_until_ready(q1)
    q2 = jax.block_until_ready(q2)
    assert q1.shape == (batch, 1) and q2.shape == (batch, 1)
    assert jnp.allclose(q1, r1, atol=1e-5, rtol=1e-5)
    assert jnp.allclose(q2, r2, atol=1e-5, rtol=1e-5)

    # --- optional bf16-weight path (v6e/v7x lever); loose tolerance ---
    fused_bf16 = fuse_critic_params(params, feature_dim, action_dim,
                                    hidden_dim, use_bf16=True)
    q1b, q2b = critic_forward(obs, action, fused_bf16)
    q1b = jax.block_until_ready(q1b)
    q2b = jax.block_until_ready(q2b)
    assert jnp.allclose(q1b, r1, atol=1e-1, rtol=1e-1)
    assert jnp.allclose(q2b, r2, atol=1e-1, rtol=1e-1)

    print("KERNEL_OK")
</pallas_src>

<mosaic_0001>
module attributes {stable_mosaic.version = 11 : i64} {
  func.func @_critic_kernel(%arg0: i32, %arg1: memref<8x32xf32, #tpu.memory_space<vmem>>, %arg2: memref<8x4xf32, #tpu.memory_space<vmem>>, %arg3: memref<32x256xf32, #tpu.memory_space<vmem>>, %arg4: memref<4x256xf32, #tpu.memory_space<vmem>>, %arg5: memref<1x256xf32, #tpu.memory_space<vmem>>, %arg6: memref<128x128xf32, #tpu.memory_space<vmem>>, %arg7: memref<1x128xf32, #tpu.memory_space<vmem>>, %arg8: memref<128x128xf32, #tpu.memory_space<vmem>>, %arg9: memref<1x128xf32, #tpu.memory_space<vmem>>, %arg10: memref<128x8xf32, #tpu.memory_space<vmem>>, %arg11: memref<128x8xf32, #tpu.memory_space<vmem>>, %arg12: memref<1x8xf32, #tpu.memory_space<vmem>>, %arg13: memref<8x8xf32, #tpu.memory_space<vmem>>) attributes {dimension_semantics = [#tpu.dimension_semantics<parallel>], iteration_bounds = array<i64: 1>, scalar_prefetch = 0 : i64, scratch_operands = 0 : i64, tpu.core_type = #tpu.core_type<tc>, window_params = [{transform_indices = @transform_0, window_bounds = array<i64: 8, 32>}, {transform_indices = @transform_1, window_bounds = array<i64: 8, 4>}, {pipeline_mode = #tpu.pipeline_mode<synchronous>, transform_indices = @transform_2, window_bounds = array<i64: 32, 256>}, {pipeline_mode = #tpu.pipeline_mode<synchronous>, transform_indices = @transform_3, window_bounds = array<i64: 4, 256>}, {pipeline_mode = #tpu.pipeline_mode<synchronous>, transform_indices = @transform_4, window_bounds = array<i64: 1, 256>}, {pipeline_mode = #tpu.pipeline_mode<synchronous>, transform_indices = @transform_5, window_bounds = array<i64: 128, 128>}, {pipeline_mode = #tpu.pipeline_mode<synchronous>, transform_indices = @transform_6, window_bounds = array<i64: 1, 128>}, {pipeline_mode = #tpu.pipeline_mode<synchronous>, transform_indices = @transform_7, window_bounds = array<i64: 128, 128>}, {pipeline_mode = #tpu.pipeline_mode<synchronous>, transform_indices = @transform_8, window_bounds = array<i64: 1, 128>}, {pipeline_mode = #tpu.pipeline_mode<synchronous>, transform_indices = @transform_9, window_bounds = array<i64: 128, 8>}, {pipeline_mode = #tpu.pipeline_mode<synchronous>, transform_indices = @transform_10, window_bounds = array<i64: 128, 8>}, {pipeline_mode = #tpu.pipeline_mode<synchronous>, transform_indices = @transform_11, window_bounds = array<i64: 1, 8>}, {transform_indices = @transform_12, window_bounds = array<i64: 8, 8>}]} {
    %c0 = arith.constant 0 : index
    %c0_0 = arith.constant 0 : index
    %0 = vector.load %arg1[%c0, %c0_0] : memref<8x32xf32, #tpu.memory_space<vmem>>, vector<8x32xf32>
    %c0_1 = arith.constant 0 : index
    %c0_2 = arith.constant 0 : index
    %1 = vector.load %arg3[%c0_1, %c0_2] : memref<32x256xf32, #tpu.memory_space<vmem>>, vector<32x256xf32>
    %cst = arith.constant dense<0.000000e+00> : vector<8x256xf32>
    %2 = tpu.matmul %0, %1, %cst {dimension_numbers = #tpu.dot_dimension_numbers<[1], [0], [0], [1], [0, 0, 1, 1], [], []>} : vector<8x32xf32>, vector<32x256xf32>, vector<8x256xf32> -> vector<8x256xf32>
    %c0_3 = arith.constant 0 : index
    %c0_4 = arith.constant 0 : index
    %3 = vector.load %arg5[%c0_3, %c0_4] : memref<1x256xf32, #tpu.memory_space<vmem>>, vector<1x256xf32>
    %4 = vector.broadcast %3 : vector<1x256xf32> to vector<8x256xf32>
    %5 = arith.addf %2, %4 : vector<8x256xf32>
    %c0_5 = arith.constant 0 : index
    %c0_6 = arith.constant 0 : index
    %6 = vector.load %arg2[%c0_5, %c0_6] : memref<8x4xf32, #tpu.memory_space<vmem>>, vector<8x4xf32>
    %c0_7 = arith.constant 0 : index
    %c0_8 = arith.constant 0 : index
    %7 = vector.load %arg4[%c0_7, %c0_8] : memref<4x256xf32, #tpu.memory_space<vmem>>, vector<4x256xf32>
    %8 = vector.extract_strided_slice %6 {offsets = [0, 0], sizes = [8, 1], strides = [1, 1]} : vector<8x4xf32> to vector<8x1xf32>
    %9 = vector.extract_strided_slice %7 {offsets = [0, 0], sizes = [1, 256], strides = [1, 1]} : vector<4x256xf32> to vector<1x256xf32>
    %10 = vector.broadcast %8 : vector<8x1xf32> to vector<8x256xf32>
    %11 = vector.broadcast %9 : vector<1x256xf32> to vector<8x256xf32>
    %12 = arith.mulf %10, %11 : vector<8x256xf32>
    %13 = arith.addf %5, %12 : vector<8x256xf32>
    %14 = vector.extract_strided_slice %6 {offsets = [0, 1], sizes = [8, 1], strides = [1, 1]} : vector<8x4xf32> to vector<8x1xf32>
    %15 = vector.extract_strided_slice %7 {offsets = [1, 0], sizes = [1, 256], strides = [1, 1]} : vector<4x256xf32> to vector<1x256xf32>
    %16 = vector.broadcast %14 : vector<8x1xf32> to vector<8x256xf32>
    %17 = vector.broadcast %15 : vector<1x256xf32> to vector<8x256xf32>
    %18 = arith.mulf %16, %17 : vector<8x256xf32>
    %19 = arith.addf %13, %18 : vector<8x256xf32>
    %20 = vector.extract_strided_slice %6 {offsets = [0, 2], sizes = [8, 1], strides = [1, 1]} : vector<8x4xf32> to vector<8x1xf32>
    %21 = vector.extract_strided_slice %7 {offsets = [2, 0], sizes = [1, 256], strides = [1, 1]} : vector<4x256xf32> to vector<1x256xf32>
    %22 = vector.broadcast %20 : vector<8x1xf32> to vector<8x256xf32>
    %23 = vector.broadcast %21 : vector<1x256xf32> to vector<8x256xf32>
    %24 = arith.mulf %22, %23 : vector<8x256xf32>
    %25 = arith.addf %19, %24 : vector<8x256xf32>
    %26 = vector.extract_strided_slice %6 {offsets = [0, 3], sizes = [8, 1], strides = [1, 1]} : vector<8x4xf32> to vector<8x1xf32>
    %27 = vector.extract_strided_slice %7 {offsets = [3, 0], sizes = [1, 256], strides = [1, 1]} : vector<4x256xf32> to vector<1x256xf32>
    %28 = vector.broadcast %26 : vector<8x1xf32> to vector<8x256xf32>
    %29 = vector.broadcast %27 : vector<1x256xf32> to vector<8x256xf32>
    %30 = arith.mulf %28, %29 : vector<8x256xf32>
    %31 = arith.addf %25, %30 : vector<8x256xf32>
    %cst_9 = arith.constant 0.000000e+00 : f32
    %32 = vector.broadcast %cst_9 : f32 to vector<8x256xf32>
    %33 = arith.maximumf %31, %32 : vector<8x256xf32>
    %34 = vector.extract_strided_slice %33 {offsets = [0, 0], sizes = [8, 128], strides = [1, 1]} : vector<8x256xf32> to vector<8x128xf32>
    %35 = vector.extract_strided_slice %33 {offsets = [0, 128], sizes = [8, 128], strides = [1, 1]} : vector<8x256xf32> to vector<8x128xf32>
    %c0_10 = arith.constant 0 : index
    %c0_11 = arith.constant 0 : index
    %36 = vector.load %arg6[%c0_10, %c0_11] : memref<128x128xf32, #tpu.memory_space<vmem>>, vector<128x128xf32>
    %cst_12 = arith.constant dense<0.000000e+00> : vector<8x128xf32>
    %37 = tpu.matmul %34, %36, %cst_12 {dimension_numbers = #tpu.dot_dimension_numbers<[1], [0], [0], [1], [0, 0, 1, 1], [], []>} : vector<8x128xf32>, vector<128x128xf32>, vector<8x128xf32> -> vector<8x128xf32>
    %c0_13 = arith.constant 0 : index
    %c0_14 = arith.constant 0 : index
    %38 = vector.load %arg7[%c0_13, %c0_14] : memref<1x128xf32, #tpu.memory_space<vmem>>, vector<1x128xf32>
    %39 = vector.broadcast %38 : vector<1x128xf32> to vector<8x128xf32>
    %40 = arith.addf %37, %39 : vector<8x128xf32>
    %cst_15 = arith.constant 0.000000e+00 : f32
    %41 = vector.broadcast %cst_15 : f32 to vector<8x128xf32>
    %42 = arith.maximumf %40, %41 : vector<8x128xf32>
    %c0_16 = arith.constant 0 : index
    %c0_17 = arith.constant 0 : index
    %43 = vector.load %arg8[%c0_16, %c0_17] : memref<128x128xf32, #tpu.memory_space<vmem>>, vector<128x128xf32>
    %cst_18 = arith.constant dense<0.000000e+00> : vector<8x128xf32>
    %44 = tpu.matmul %35, %43, %cst_18 {dimension_numbers = #tpu.dot_dimension_numbers<[1], [0], [0], [1], [0, 0, 1, 1], [], []>} : vector<8x128xf32>, vector<128x128xf32>, vector<8x128xf32> -> vector<8x128xf32>
    %c0_19 = arith.constant 0 : index
    %c0_20 = arith.constant 0 : index
    %45 = vector.load %arg9[%c0_19, %c0_20] : memref<1x128xf32, #tpu.memory_space<vmem>>, vector<1x128xf32>
    %46 = vector.broadcast %45 : vector<1x128xf32> to vector<8x128xf32>
    %47 = arith.addf %44, %46 : vector<8x128xf32>
    %cst_21 = arith.constant 0.000000e+00 : f32
    %48 = vector.broadcast %cst_21 : f32 to vector<8x128xf32>
    %49 = arith.maximumf %47, %48 : vector<8x128xf32>
    %c0_22 = arith.constant 0 : index
    %c0_23 = arith.constant 0 : index
    %50 = vector.load %arg10[%c0_22, %c0_23] : memref<128x8xf32, #tpu.memory_space<vmem>>, vector<128x8xf32>
    %cst_24 = arith.constant dense<0.000000e+00> : vector<8x8xf32>
    %51 = tpu.matmul %42, %50, %cst_24 {dimension_numbers = #tpu.dot_dimension_numbers<[1], [0], [0], [1], [0, 0, 1, 1], [], []>} : vector<8x128xf32>, vector<128x8xf32>, vector<8x8xf32> -> vector<8x8xf32>
    %c0_25 = arith.constant 0 : index
    %c0_26 = arith.constant 0 : index
    %52 = vector.load %arg11[%c0_25, %c0_26] : memref<128x8xf32, #tpu.memory_space<vmem>>, vector<128x8xf32>
    %cst_27 = arith.constant dense<0.000000e+00> : vector<8x8xf32>
    %53 = tpu.matmul %49, %52, %cst_27 {dimension_numbers = #tpu.dot_dimension_numbers<[1], [0], [0], [1], [0, 0, 1, 1], [], []>} : vector<8x128xf32>, vector<128x8xf32>, vector<8x8xf32> -> vector<8x8xf32>
    %54 = arith.addf %51, %53 : vector<8x8xf32>
    %c0_28 = arith.constant 0 : index
    %c0_29 = arith.constant 0 : index
    %55 = vector.load %arg12[%c0_28, %c0_29] : memref<1x8xf32, #tpu.memory_space<vmem>>, vector<1x8xf32>
    %56 = vector.broadcast %55 : vector<1x8xf32> to vector<8x8xf32>
    %57 = arith.addf %54, %56 : vector<8x8xf32>
    %c0_30 = arith.constant 0 : index
    %c0_31 = arith.constant 0 : index
    %58 = vector.load %arg13[%c0_30, %c0_31] : memref<8x8xf32, #tpu.memory_space<vmem>>, vector<8x8xf32>
    tpu.vector_store %arg13[%c0_30, %c0_31], %57 {strides = array<i32>} : memref<8x8xf32, #tpu.memory_space<vmem>>, vector<8x8xf32>,
    return
  }
  func.func @transform_0(%arg0: i32) -> (i32, i32) {
    %c0_i32 = arith.constant 0 : i32
    %c0_i32_0 = arith.constant 0 : i32
    return %arg0, %c0_i32 : i32, i32
  }
  func.func @transform_1(%arg0: i32) -> (i32, i32) {
    %c0_i32 = arith.constant 0 : i32
    %c0_i32_0 = arith.constant 0 : i32
    return %arg0, %c0_i32 : i32, i32
  }
  func.func @transform_2(%arg0: i32) -> (i32, i32) {
    %c0_i32 = arith.constant 0 : i32
    %c0_i32_0 = arith.constant 0 : i32
    %c0_i32_1 = arith.constant 0 : i32
    return %c0_i32, %c0_i32_0 : i32, i32
  }
  func.func @transform_3(%arg0: i32) -> (i32, i32) {
    %c0_i32 = arith.constant 0 : i32
    %c0_i32_0 = arith.constant 0 : i32
    %c0_i32_1 = arith.constant 0 : i32
    return %c0_i32, %c0_i32_0 : i32, i32
  }
  func.func @transform_4(%arg0: i32) -> (i32, i32) {
    %c0_i32 = arith.constant 0 : i32
    %c0_i32_0 = arith.constant 0 : i32
    %c0_i32_1 = arith.constant 0 : i32
    return %c0_i32, %c0_i32_0 : i32, i32
  }
  func.func @transform_5(%arg0: i32) -> (i32, i32) {
    %c0_i32 = arith.constant 0 : i32
    %c0_i32_0 = arith.constant 0 : i32
    %c0_i32_1 = arith.constant 0 : i32
    return %c0_i32, %c0_i32_0 : i32, i32
  }
  func.func @transform_6(%arg0: i32) -> (i32, i32) {
    %c0_i32 = arith.constant 0 : i32
    %c0_i32_0 = arith.constant 0 : i32
    %c0_i32_1 = arith.constant 0 : i32
    return %c0_i32, %c0_i32_0 : i32, i32
  }
  func.func @transform_7(%arg0: i32) -> (i32, i32) {
    %c0_i32 = arith.constant 0 : i32
    %c0_i32_0 = arith.constant 0 : i32
    %c0_i32_1 = arith.constant 0 : i32
    return %c0_i32, %c0_i32_0 : i32, i32
  }
  func.func @transform_8(%arg0: i32) -> (i32, i32) {
    %c0_i32 = arith.constant 0 : i32
    %c0_i32_0 = arith.constant 0 : i32
    %c0_i32_1 = arith.constant 0 : i32
    return %c0_i32, %c0_i32_0 : i32, i32
  }
  func.func @transform_9(%arg0: i32) -> (i32, i32) {
    %c0_i32 = arith.constant 0 : i32
    %c0_i32_0 = arith.constant 0 : i32
    %c0_i32_1 = arith.constant 0 : i32
    return %c0_i32, %c0_i32_0 : i32, i32
  }
  func.func @transform_10(%arg0: i32) -> (i32, i32) {
    %c0_i32 = arith.constant 0 : i32
    %c0_i32_0 = arith.constant 0 : i32
    %c0_i32_1 = arith.constant 0 : i32
    return %c0_i32, %c0_i32_0 : i32, i32
  }
  func.func @transform_11(%arg0: i32) -> (i32, i32) {
    %c0_i32 = arith.constant 0 : i32
    %c0_i32_0 = arith.constant 0 : i32
    %c0_i32_1 = arith.constant 0 : i32
    return %c0_i32, %c0_i32_0 : i32, i32
  }
  func.func @transform_12(%arg0: i32) -> (i32, i32) {
    %c0_i32 = arith.constant 0 : i32
    %c0_i32_0 = arith.constant 0 : i32
    return %arg0, %c0_i32 : i32, i32
  }
}

</mosaic_0001>

<llo_original>
// kernel: critic_forward.1
$region0: #{critic_forward.1}
  #allocation0 [shape = 'u32[]', space=smem, size = 0x4, offset = 0x4, fixed_abs, tag = 'smem constant byte address 0x4 - core index']
  #allocation1 [shape = 'u32[144,128]{1,0:T(1,128)}', space=vmem, size = 0x12000, scoped, tag = 'internal scratch']
  %s0 = inlined_call_operand.vmem [shape: f32[8,32], index: 0, kind: input, shape index: {}]
  %s1 = inlined_call_operand.vmem [shape: f32[8,4], index: 1, kind: input, shape index: {}]
  %s2 = inlined_call_operand.hbm [shape: f32[32,256], index: 2, kind: input, shape index: {}]
  %s3 = inlined_call_operand.hbm [shape: f32[4,256], index: 3, kind: input, shape index: {}]
  %s4 = inlined_call_operand.vmem [shape: f32[1,256], index: 4, kind: input, shape index: {}]
  %s5 = inlined_call_operand.vmem [shape: f32[128,128], index: 5, kind: input, shape index: {}]
  %s6 = inlined_call_operand.vmem [shape: f32[1,128], index: 6, kind: input, shape index: {}]
  %s7 = inlined_call_operand.vmem [shape: f32[128,128], index: 7, kind: input, shape index: {}]
  %s8 = inlined_call_operand.vmem [shape: f32[1,128], index: 8, kind: input, shape index: {}]
  %s9 = inlined_call_operand.vmem [shape: f32[128,8], index: 9, kind: input, shape index: {}]
  %s10 = inlined_call_operand.vmem [shape: f32[128,8], index: 10, kind: input, shape index: {}]
  %s11 = inlined_call_operand.vmem [shape: f32[1,8], index: 11, kind: input, shape index: {}]
  %s12 = inlined_call_operand.vmem [shape: f32[8,8], index: 12, kind: output, shape index: {}]
  %s13 = sld [smem:[#allocation0]]
  $region66: #{critic_forward.1} parent=0
    _
  %s15 = ssub.s32 1, %s13
  %s16 = scalar_select 0, %s15, %s13
  $region1: #{critic_forward.1} parent=0
    #allocation2 [shape = 'u8[32768]{0}', space=vmem, size = 0x8000, scoped, tag = 'input window, operand 2, single buffered']
    #allocation3 [shape = 's32[1]{0}', space=sflag, size = 0x4, scoped, tag = 'scoped memory for critic_forward.1']
    #allocation4 [shape = 'u8[4096]{0}', space=vmem, size = 0x1000, scoped, tag = 'input window, operand 3, single buffered']
    #allocation5 [shape = 's32[1]{0}', space=sflag, size = 0x4, scoped, tag = 'scoped memory for critic_forward.1']
    %17 = vsyncpa [#allocation3], 0
    %18 = vsyncpa [#allocation5], 0
    // Predicated region
    $region2: #{critic_forward.1} parent=1 // pred_check
      _
    $region3: #{critic_forward.1} parent=1 // pred_check_branch
      %20 = sbr.rel (0) target = $region5
    $region4: #{critic_forward.1} parent=1 // pred_region
      _
    $region5: #{critic_forward.1} parent=1 // pred_fallthru
      _
    // Predicated region
    $region6: #{critic_forward.1} parent=1 // pred_check
      _
    $region7: #{critic_forward.1} parent=1 // pred_check_branch
      %22 = sbr.rel (0) target = $region9
    $region8: #{critic_forward.1} parent=1 // pred_region
      _
    $region9: #{critic_forward.1} parent=1 // pred_fallthru
      _
    // Predicated region
    $region10: #{critic_forward.1} parent=1 // pred_check
      _
    $region11: #{critic_forward.1} parent=1 // pred_check_branch
      %24 = sbr.rel (0) target = $region13
    $region12: #{critic_forward.1} parent=1 // pred_region
      %s26 = ssub.s32 1024, 1024
      %27 = vsyncadd [#allocation3], %s26
      %s28 = sshll.u32 [#allocation2], 4
      %s29 = int_to_ptr.vmem [resolvable:$true] %s28
      %34 = dma.hbm_to_vmem [thread:$0]  %s2, 1024, %s29, [#allocation3], 256, 256, 16
    $region13: #{critic_forward.1} parent=1 // pred_fallthru
      _
    // Predicated region
    $region14: #{critic_forward.1} parent=1 // pred_check
      _
    $region15: #{critic_forward.1} parent=1 // pred_check_branch
      %36 = sbr.rel (0) target = $region17
    $region16: #{critic_forward.1} parent=1 // pred_region
      %s38 = ssub.s32 128, 128
      %39 = vsyncadd [#allocation5], %s38
      %s41 = sshll.u32 [#allocation4], 4
      %s42 = int_to_ptr.vmem [resolvable:$true] %s41
      %44 = dma.hbm_to_vmem [thread:$0]  %s3, 128, %s42, [#allocation5]
    $region17: #{critic_forward.1} parent=1 // pred_fallthru
      _
    // Predicated region
    $region18: #{critic_forward.1} parent=1 // pred_check
      _
    $region19: #{critic_forward.1} parent=1 // pred_check_branch
      %46 = sbr.rel (0) target = $region21
    $region20: #{critic_forward.1} parent=1 // pred_region
      _
    $region21: #{critic_forward.1} parent=1 // pred_fallthru
      _
    // Predicated region
    $region22: #{critic_forward.1} parent=1 // pred_check
      _
    $region23: #{critic_forward.1} parent=1 // pred_check_branch
      %48 = sbr.rel (0) target = $region25
    $region24: #{critic_forward.1} parent=1 // pred_region
      _
    $region25: #{critic_forward.1} parent=1 // pred_fallthru
      _
    // Predicated region
    $region26: #{critic_forward.1} parent=1 // pred_check
      _
    $region27: #{critic_forward.1} parent=1 // pred_check_branch
      %50 = sbr.rel (0) target = $region29
    $region28: #{critic_forward.1} parent=1 // pred_region
      _
    $region29: #{critic_forward.1} parent=1 // pred_fallthru
      _
    // Predicated region
    $region30: #{critic_forward.1} parent=1 // pred_check
      _
    $region31: #{critic_forward.1} parent=1 // pred_check_branch
      %52 = sbr.rel (0) target = $region33
    $region32: #{critic_forward.1} parent=1 // pred_region
      _
    $region33: #{critic_forward.1} parent=1 // pred_fallthru
      _
    // Predicated region
    $region34: #{critic_forward.1} parent=1 // pred_check
      _
    $region35: #{critic_forward.1} parent=1 // pred_check_branch
      %54 = sbr.rel (0) target = $region37
    $region36: #{critic_forward.1} parent=1 // pred_region
      _
    $region37: #{critic_forward.1} parent=1 // pred_fallthru
      _
    // Predicated region
    $region38: #{critic_forward.1} parent=1 // pred_check
      _
    $region39: #{critic_forward.1} parent=1 // pred_check_branch
      %56 = sbr.rel (0) target = $region41
    $region40: #{critic_forward.1} parent=1 // pred_region
      _
    $region41: #{critic_forward.1} parent=1 // pred_fallthru
      _
    // Predicated region
    $region42: #{critic_forward.1} parent=1 // pred_check
      _
    $region43: #{critic_forward.1} parent=1 // pred_check_branch
      %58 = sbr.rel (0) target = $region45
    $region44: #{critic_forward.1} parent=1 // pred_region
      _
    $region45: #{critic_forward.1} parent=1 // pred_fallthru
      _
    // Predicated region
    $region46: #{critic_forward.1} parent=1 // pred_check
      _
    $region47: #{critic_forward.1} parent=1 // pred_check_branch
      %60 = sbr.rel (0) target = $region49
    $region48: #{critic_forward.1} parent=1 // pred_region
      _
    $region49: #{critic_forward.1} parent=1 // pred_fallthru
      _
    // Predicated region
    $region50: #{critic_forward.1} parent=1 // pred_check
      _
    $region51: #{critic_forward.1} parent=1 // pred_check_branch
      %62 = sbr.rel (0) target = $region53
    $region52: #{critic_forward.1} parent=1 // pred_region
      %63 = dma.done [#allocation3], 1024
    $region53: #{critic_forward.1} parent=1 // pred_fallthru
      _
    // Predicated region
    $region54: #{critic_forward.1} parent=1 // pred_check
      _
    $region55: #{critic_forward.1} parent=1 // pred_check_branch
      %65 = sbr.rel (0) target = $region57
    $region56: #{critic_forward.1} parent=1 // pred_region
      %66 = dma.done [#allocation5], 128
    $region57: #{critic_forward.1} parent=1 // pred_fallthru
      _
    %v67 = vld [vmem:[%s0] sm:$0xff]
    %v68 = vld [vmem:[#allocation2] sm:$0xff]
    %v69 = vld [vmem:[#allocation2 + $0x8] sm:$0xff]
    %v70 = vld [vmem:[#allocation2 + $0x10] sm:$0xff]
    %v71 = vld [vmem:[#allocation2 + $0x18] sm:$0xff]
    %v72 = vld [vmem:[#allocation2 + $0x20] sm:$0xff]
    %v73 = vld [vmem:[#allocation2 + $0x28] sm:$0xff]
    %v74 = vld [vmem:[#allocation2 + $0x30] sm:$0xff]
    %v75 = vld [vmem:[#allocation2 + $0x38] sm:$0xff]
    %v76 = vld [vmem:[%s4] sm:$0x3]
    %v78 = vlaneseq
    %v79 = vshrl.u32 %v78, 7
    %v80 = vsub.s32 0, %v79
    %v81 = vrot.slane %v76, %v80
    %v82 = vlaneseq
    %v83 = vshrl.u32 %v82, 7
    %v84 = vsub.s32 1, %v83
    %v85 = vrot.slane %v76, %v84
    %vm88 = vcmask 261120
    %v90 = vsel %vm88, %v67, 0
    %92 = vmatprep.subr.mxu0 0.0
    %93 = vmatpush1.msra.mxu0 0.0
    %94 = vmatprep.subr.mxu0 0.0
    %95 = vmatpush1.msra.mxu0 0.0
    %96 = vmatprep.subr.mxu0 0.0
    %97 = vmatpush1.msra.mxu0 0.0
    %98 = vmatprep.subr.mxu0 0.0
    %99 = vmatpush1.msra.mxu0 0.0
    %100 = vmatprep.subr.mxu0 0.0
    %101 = vmatpush1.msra.mxu0 0.0
    %102 = vmatprep.subr.mxu0 0.0
    %103 = vmatpush1.msra.mxu0 0.0
    %104 = vmatprep.subr.mxu0 0.0
    %105 = vmatpush1.msra.mxu0 0.0
    %106 = vmatprep.subr.mxu0 0.0
    %107 = vmatpush1.msra.mxu0 0.0
    %108 = vmatprep.subr.mxu0 0.0
    %109 = vmatpush1.msra.mxu0 0.0
    %110 = vmatprep.subr.mxu0 0.0
    %111 = vmatpush1.msra.mxu0 0.0
    %112 = vmatprep.subr.mxu0 0.0
    %113 = vmatpush1.msra.mxu0 0.0
    %114 = vmatprep.subr.mxu0 0.0
    %115 = vmatpush1.msra.mxu0 0.0
    %116 = vmatprep.subr.mxu0 %v75
    %117 = vmatpush1.msra.mxu0 %v74
    %118 = vmatprep.subr.mxu0 %v73
    %119 = vmatpush1.msra.mxu0 %v72
    %120 = vmatprep.subr.mxu0 %v71
    %121 = vmatpush1.msra.mxu0 %v70
    %122 = vmatprep.subr.mxu0 %v69
    %123 = vmatpush1.msra.mxu0 %v68
    %124 = vmatprep.subr.mxu0 0.0
    %125 = vmatpush2.msra.mxu0 0.0
    %126 = vmatprep.subr.mxu0 0.0
    %127 = vmatpush2.msra.mxu0 0.0
    %128 = vmatprep.subr.mxu0 0.0
    %129 = vmatpush2.msra.mxu0 0.0
    %130 = vmatprep.subr.mxu0 0.0
    %131 = vmatpush2.msra.mxu0 0.0
    %132 = vmatprep.subr.mxu0 0.0
    %133 = vmatpush2.msra.mxu0 0.0
    %134 = vmatprep.subr.mxu0 0.0
    %135 = vmatpush2.msra.mxu0 0.0
    %136 = vmatprep.subr.mxu0 0.0
    %137 = vmatpush2.msra.mxu0 0.0
    %138 = vmatprep.subr.mxu0 0.0
    %139 = vmatpush2.msra.mxu0 0.0
    %140 = vmatprep.subr.mxu0 0.0
    %141 = vmatpush2.msra.mxu0 0.0
    %142 = vmatprep.subr.mxu0 0.0
    %143 = vmatpush2.msra.mxu0 0.0
    %144 = vmatprep.subr.mxu0 0.0
    %145 = vmatpush2.msra.mxu0 0.0
    %146 = vmatprep.subr.mxu0 0.0
    %147 = vmatpush2.msra.mxu0 0.0
    %148 = vmatprep.subr.mxu0 0.0
    %149 = vmatpush2.msra.mxu0 0.0
    %150 = vmatprep.subr.mxu0 0.0
    %151 = vmatpush2.msra.mxu0 0.0
    %152 = vmatprep.subr.mxu0 0.0
    %153 = vmatpush2.msra.mxu0 0.0
    %154 = vmatprep.subr.mxu0 0.0
    %155 = vmatpush2.msra.mxu0 0.0
    %156 = vmatprep.mubr.f32.mxu0 0.0
    %157 = vmatmul.mubr.f32.gmra.mxu0 %v90
    %v158 = vpop.f32.mrf.mxu0
    %v159 = vadd.f32 %v81, %v158
    %v160 = vpop.f32.mrf.mxu0
    %v161 = vadd.f32 %v85, %v160
    %162 = vdwg.mxu0
    %v163 = vld [vmem:[%s1] sm:$0xff]
    %v164 = vld [vmem:[#allocation4] sm:$0xff]
    %166 = vset.pattern.permute.xlu0 0
    %167 = vperm.xlu0 %166, %v163
    %v168 = vpop.permute.xlu0 %167
    %v171 = vlaneseq
    %v172 = vshrl.u32 %v171, 7
    %v173 = vsub.s32 0, %v172
    %v174 = vrot.slane %v164, %v173
    %v175 = vlaneseq
    %v176 = vshrl.u32 %v175, 7
    %v177 = vsub.s32 4, %v176
    %v178 = vrot.slane %v164, %v177
    %v181 = vlaneseq
    %v182 = vshrl.u32 %v181, 7
    %v183 = vsub.s32 0, %v182
    %v184 = vrot.slane %v174, %v183
    %v185 = vlaneseq
    %v186 = vshrl.u32 %v185, 7
    %v187 = vsub.s32 0, %v186
    %v188 = vrot.slane %v178, %v187
    %v189 = vmul.f32 %v168, %v184
    %v190 = vmul.f32 %v168, %v188
    %v191 = vadd.f32 %v159, %v189
    %v192 = vadd.f32 %v161, %v190
    %193 = vset.pattern.permute.xlu0 1
    %194 = vperm.xlu0 %193, %v163
    %v195 = vpop.permute.xlu0 %194
    %v197 = vlaneseq
    %v198 = vshrl.u32 %v197, 7
    %v199 = vsub.s32 1, %v198
    %v200 = vrot.slane %v164, %v199
    %v201 = vlaneseq
    %v202 = vshrl.u32 %v201, 7
    %v203 = vsub.s32 5, %v202
    %v204 = vrot.slane %v164, %v203
    %v207 = vlaneseq
    %v208 = vshrl.u32 %v207, 7
    %v209 = vsub.s32 1, %v208
    %v210 = vrot.slane %v200, %v209
    %v211 = vlaneseq
    %v212 = vshrl.u32 %v211, 7
    %v213 = vsub.s32 1, %v212
    %v214 = vrot.slane %v204, %v213
    %v215 = vmul.f32 %v195, %v210
    %v216 = vmul.f32 %v195, %v214
    %v217 = vadd.f32 %v191, %v215
    %v218 = vadd.f32 %v192, %v216
    %219 = vset.pattern.permute.xlu0 2
    %220 = vperm.xlu0 %219, %v163
    %v221 = vpop.permute.xlu0 %220
    %v223 = vlaneseq
    %v224 = vshrl.u32 %v223, 7
    %v225 = vsub.s32 2, %v224
    %v226 = vrot.slane %v164, %v225
    %v227 = vlaneseq
    %v228 = vshrl.u32 %v227, 7
    %v229 = vsub.s32 6, %v228
    %v230 = vrot.slane %v164, %v229
    %v233 = vlaneseq
    %v234 = vshrl.u32 %v233, 7
    %v235 = vsub.s32 2, %v234
    %v236 = vrot.slane %v226, %v235
    %v237 = vlaneseq
    %v238 = vshrl.u32 %v237, 7
    %v239 = vsub.s32 2, %v238
    %v240 = vrot.slane %v230, %v239
    %v241 = vmul.f32 %v221, %v236
    %v242 = vmul.f32 %v221, %v240
    %v243 = vadd.f32 %v217, %v241
    %v244 = vadd.f32 %v218, %v242
    %245 = vset.pattern.permute.xlu0 3
    %246 = vperm.xlu0 %245, %v163
    %v247 = vpop.permute.xlu0 %246
    %v249 = vlaneseq
    %v250 = vshrl.u32 %v249, 7
    %v251 = vsub.s32 3, %v250
    %v252 = vrot.slane %v164, %v251
    %v253 = vlaneseq
    %v254 = vshrl.u32 %v253, 7
    %v255 = vsub.s32 7, %v254
    %v256 = vrot.slane %v164, %v255
    %v259 = vlaneseq
    %v260 = vshrl.u32 %v259, 7
    %v261 = vsub.s32 3, %v260
    %v262 = vrot.slane %v252, %v261
    %v263 = vlaneseq
    %v264 = vshrl.u32 %v263, 7
    %v265 = vsub.s32 3, %v264
    %v266 = vrot.slane %v256, %v265
    %v267 = vmul.f32 %v247, %v262
    %v268 = vmul.f32 %v247, %v266
    %v269 = vadd.f32 %v243, %v267
    %v270 = vadd.f32 %v244, %v268
    %v271 = vmax.f32 %v269, 0.0
    %v272 = vmax.f32 %v270, 0.0
    %v273 = vld [vmem:[%s5] sm:$0xff]
    %v274 = vld [vmem:[%s5 + $0x8] sm:$0xff]
    %v275 = vld [vmem:[%s5 + $0x10] sm:$0xff]
    %v276 = vld [vmem:[%s5 + $0x18] sm:$0xff]
    %v277 = vld [vmem:[%s5 + $0x20] sm:$0xff]
    %v278 = vld [vmem:[%s5 + $0x28] sm:$0xff]
    %v279 = vld [vmem:[%s5 + $0x30] sm:$0xff]
    %v280 = vld [vmem:[%s5 + $0x38] sm:$0xff]
    %v281 = vld [vmem:[%s5 + $0x40] sm:$0xff]
    %v282 = vld [vmem:[%s5 + $0x48] sm:$0xff]
    %v283 = vld [vmem:[%s5 + $0x50] sm:$0xff]
    %v284 = vld [vmem:[%s5 + $0x58] sm:$0xff]
    %v285 = vld [vmem:[%s5 + $0x60] sm:$0xff]
    %v286 = vld [vmem:[%s5 + $0x68] sm:$0xff]
    %v287 = vld [vmem:[%s5 + $0x70] sm:$0xff]
    %v288 = vld [vmem:[%s5 + $0x78] sm:$0xff]
    %v289 = vld [vmem:[%s6] sm:$0x1]
    %v291 = vlaneseq
    %v292 = vshrl.u32 %v291, 7
    %v293 = vsub.s32 0, %v292
    %v294 = vrot.slane %v289, %v293
    %296 = vmatprep.subr.mxu0 0.0
    %297 = vmatpush1.msra.mxu0 %v288
    %298 = vmatprep.subr.mxu0 0.0
    %299 = vmatpush1.msra.mxu0 %v287
    %300 = vmatprep.subr.mxu0 0.0
    %301 = vmatpush1.msra.mxu0 %v286
    %302 = vmatprep.subr.mxu0 0.0
    %303 = vmatpush1.msra.mxu0 %v285
    %304 = vmatprep.subr.mxu0 0.0
    %305 = vmatpush1.msra.mxu0 %v284
    %306 = vmatprep.subr.mxu0 0.0
    %307 = vmatpush1.msra.mxu0 %v283
    %308 = vmatprep.subr.mxu0 0.0
    %309 = vmatpush1.msra.mxu0 %v282
    %310 = vmatprep.subr.mxu0 0.0
    %311 = vmatpush1.msra.mxu0 %v281
    %312 = vmatprep.subr.mxu0 0.0
    %313 = vmatpush1.msra.mxu0 %v280
    %314 = vmatprep.subr.mxu0 0.0
    %315 = vmatpush1.msra.mxu0 %v279
    %316 = vmatprep.subr.mxu0 0.0
    %317 = vmatpush1.msra.mxu0 %v278
    %318 = vmatprep.subr.mxu0 0.0
    %319 = vmatpush1.msra.mxu0 %v277
    %320 = vmatprep.subr.mxu0 0.0
    %321 = vmatpush1.msra.mxu0 %v276
    %322 = vmatprep.subr.mxu0 0.0
    %323 = vmatpush1.msra.mxu0 %v275
    %324 = vmatprep.subr.mxu0 0.0
    %325 = vmatpush1.msra.mxu0 %v274
    %326 = vmatprep.subr.mxu0 0.0
    %327 = vmatpush1.msra.mxu0 %v273
    %328 = vmatprep.subr.mxu0 0.0
    %329 = vmatpush2.msra.mxu0 0.0
    %330 = vmatprep.subr.mxu0 0.0
    %331 = vmatpush2.msra.mxu0 0.0
    %332 = vmatprep.subr.mxu0 0.0
    %333 = vmatpush2.msra.mxu0 0.0
    %334 = vmatprep.subr.mxu0 0.0
    %335 = vmatpush2.msra.mxu0 0.0
    %336 = vmatprep.subr.mxu0 0.0
    %337 = vmatpush2.msra.mxu0 0.0
    %338 = vmatprep.subr.mxu0 0.0
    %339 = vmatpush2.msra.mxu0 0.0
    %340 = vmatprep.subr.mxu0 0.0
    %341 = vmatpush2.msra.mxu0 0.0
    %342 = vmatprep.subr.mxu0 0.0
    %343 = vmatpush2.msra.mxu0 0.0
    %344 = vmatprep.subr.mxu0 0.0
    %345 = vmatpush2.msra.mxu0 0.0
    %346 = vmatprep.subr.mxu0 0.0
    %347 = vmatpush2.msra.mxu0 0.0
    %348 = vmatprep.subr.mxu0 0.0
    %349 = vmatpush2.msra.mxu0 0.0
    %350 = vmatprep.subr.mxu0 0.0
    %351 = vmatpush2.msra.mxu0 0.0
    %352 = vmatprep.subr.mxu0 0.0
    %353 = vmatpush2.msra.mxu0 0.0
    %354 = vmatprep.subr.mxu0 0.0
    %355 = vmatpush2.msra.mxu0 0.0
    %356 = vmatprep.subr.mxu0 0.0
    %357 = vmatpush2.msra.mxu0 0.0
    %358 = vmatprep.subr.mxu0 0.0
    %359 = vmatpush2.msra.mxu0 0.0
    %360 = vmatprep.mubr.f32.mxu0 0.0
    %361 = vmatmul.mubr.f32.gmra.mxu0 %v271
    %v362 = vpop.f32.mrf.mxu0
    %v363 = vadd.f32 %v294, %v362
    %v364 = vpop.f32.mrf.mxu0
    %365 = vdwg.mxu0
    %v366 = vmax.f32 %v363, 0.0
    %v367 = vld [vmem:[%s7] sm:$0xff]
    %v368 = vld [vmem:[%s7 + $0x8] sm:$0xff]
    %v369 = vld [vmem:[%s7 + $0x10] sm:$0xff]
    %v370 = vld [vmem:[%s7 + $0x18] sm:$0xff]
    %v371 = vld [vmem:[%s7 + $0x20] sm:$0xff]
    %v372 = vld [vmem:[%s7 + $0x28] sm:$0xff]
    %v373 = vld [vmem:[%s7 + $0x30] sm:$0xff]
    %v374 = vld [vmem:[%s7 + $0x38] sm:$0xff]
    %v375 = vld [vmem:[%s7 + $0x40] sm:$0xff]
    %v376 = vld [vmem:[%s7 + $0x48] sm:$0xff]
    %v377 = vld [vmem:[%s7 + $0x50] sm:$0xff]
    %v378 = vld [vmem:[%s7 + $0x58] sm:$0xff]
    %v379 = vld [vmem:[%s7 + $0x60] sm:$0xff]
    %v380 = vld [vmem:[%s7 + $0x68] sm:$0xff]
    %v381 = vld [vmem:[%s7 + $0x70] sm:$0xff]
    %v382 = vld [vmem:[%s7 + $0x78] sm:$0xff]
    %v383 = vld [vmem:[%s8] sm:$0x1]
    %v385 = vlaneseq
    %v386 = vshrl.u32 %v385, 7
    %v387 = vsub.s32 0, %v386
    %v388 = vrot.slane %v383, %v387
    %390 = vmatprep.subr.mxu0 0.0
    %391 = vmatpush1.msra.mxu0 %v382
    %392 = vmatprep.subr.mxu0 0.0
    %393 = vmatpush1.msra.mxu0 %v381
    %394 = vmatprep.subr.mxu0 0.0
    %395 = vmatpush1.msra.mxu0 %v380
    %396 = vmatprep.subr.mxu0 0.0
    %397 = vmatpush1.msra.mxu0 %v379
    %398 = vmatprep.subr.mxu0 0.0
    %399 = vmatpush1.msra.mxu0 %v378
    %400 = vmatprep.subr.mxu0 0.0
    %401 = vmatpush1.msra.mxu0 %v377
    %402 = vmatprep.subr.mxu0 0.0
    %403 = vmatpush1.msra.mxu0 %v376
    %404 = vmatprep.subr.mxu0 0.0
    %405 = vmatpush1.msra.mxu0 %v375
    %406 = vmatprep.subr.mxu0 0.0
    %407 = vmatpush1.msra.mxu0 %v374
    %408 = vmatprep.subr.mxu0 0.0
    %409 = vmatpush1.msra.mxu0 %v373
    %410 = vmatprep.subr.mxu0 0.0
    %411 = vmatpush1.msra.mxu0 %v372
    %412 = vmatprep.subr.mxu0 0.0
    %413 = vmatpush1.msra.mxu0 %v371
    %414 = vmatprep.subr.mxu0 0.0
    %415 = vmatpush1.msra.mxu0 %v370
    %416 = vmatprep.subr.mxu0 0.0
    %417 = vmatpush1.msra.mxu0 %v369
    %418 = vmatprep.subr.mxu0 0.0
    %419 = vmatpush1.msra.mxu0 %v368
    %420 = vmatprep.subr.mxu0 0.0
    %421 = vmatpush1.msra.mxu0 %v367
    %422 = vmatprep.subr.mxu0 0.0
    %423 = vmatpush2.msra.mxu0 0.0
    %424 = vmatprep.subr.mxu0 0.0
    %425 = vmatpush2.msra.mxu0 0.0
    %426 = vmatprep.subr.mxu0 0.0
    %427 = vmatpush2.msra.mxu0 0.0
    %428 = vmatprep.subr.mxu0 0.0
    %429 = vmatpush2.msra.mxu0 0.0
    %430 = vmatprep.subr.mxu0 0.0
    %431 = vmatpush2.msra.mxu0 0.0
    %432 = vmatprep.subr.mxu0 0.0
    %433 = vmatpush2.msra.mxu0 0.0
    %434 = vmatprep.subr.mxu0 0.0
    %435 = vmatpush2.msra.mxu0 0.0
    %436 = vmatprep.subr.mxu0 0.0
    %437 = vmatpush2.msra.mxu0 0.0
    %438 = vmatprep.subr.mxu0 0.0
    %439 = vmatpush2.msra.mxu0 0.0
    %440 = vmatprep.subr.mxu0 0.0
    %441 = vmatpush2.msra.mxu0 0.0
    %442 = vmatprep.subr.mxu0 0.0
    %443 = vmatpush2.msra.mxu0 0.0
    %444 = vmatprep.subr.mxu0 0.0
    %445 = vmatpush2.msra.mxu0 0.0
    %446 = vmatprep.subr.mxu0 0.0
    %447 = vmatpush2.msra.mxu0 0.0
    %448 = vmatprep.subr.mxu0 0.0
    %449 = vmatpush2.msra.mxu0 0.0
    %450 = vmatprep.subr.mxu0 0.0
    %451 = vmatpush2.msra.mxu0 0.0
    %452 = vmatprep.subr.mxu0 0.0
    %453 = vmatpush2.msra.mxu0 0.0
    %454 = vmatprep.mubr.f32.mxu0 0.0
    %455 = vmatmul.mubr.f32.gmra.mxu0 %v272
    %v456 = vpop.f32.mrf.mxu0
    %v457 = vadd.f32 %v388, %v456
    %v458 = vpop.f32.mrf.mxu0
    %459 = vdwg.mxu0
    %v460 = vmax.f32 %v457, 0.0
    %v461 = vld [vmem:[%s9] sm:$0xff]
    %v462 = vld [vmem:[%s9 + $0x8] sm:$0xff]
    %v463 = vld [vmem:[%s9 + $0x10] sm:$0xff]
    %v464 = vld [vmem:[%s9 + $0x18] sm:$0xff]
    %v465 = vld [vmem:[%s9 + $0x20] sm:$0xff]
    %v466 = vld [vmem:[%s9 + $0x28] sm:$0xff]
    %v467 = vld [vmem:[%s9 + $0x30] sm:$0xff]
    %v468 = vld [vmem:[%s9 + $0x38] sm:$0xff]
    %v469 = vld [vmem:[%s9 + $0x40] sm:$0xff]
    %v470 = vld [vmem:[%s9 + $0x48] sm:$0xff]
    %v471 = vld [vmem:[%s9 + $0x50] sm:$0xff]
    %v472 = vld [vmem:[%s9 + $0x58] sm:$0xff]
    %v473 = vld [vmem:[%s9 + $0x60] sm:$0xff]
    %v474 = vld [vmem:[%s9 + $0x68] sm:$0xff]
    %v475 = vld [vmem:[%s9 + $0x70] sm:$0xff]
    %v476 = vld [vmem:[%s9 + $0x78] sm:$0xff]
    %v477 = vld [vmem:[%s10] sm:$0xff]
    %v478 = vld [vmem:[%s10 + $0x8] sm:$0xff]
    %v479 = vld [vmem:[%s10 + $0x10] sm:$0xff]
    %v480 = vld [vmem:[%s10 + $0x18] sm:$0xff]
    %v481 = vld [vmem:[%s10 + $0x20] sm:$0xff]
    %v482 = vld [vmem:[%s10 + $0x28] sm:$0xff]
    %v483 = vld [vmem:[%s10 + $0x30] sm:$0xff]
    %v484 = vld [vmem:[%s10 + $0x38] sm:$0xff]
    %v485 = vld [vmem:[%s10 + $0x40] sm:$0xff]
    %v486 = vld [vmem:[%s10 + $0x48] sm:$0xff]
    %v487 = vld [vmem:[%s10 + $0x50] sm:$0xff]
    %v488 = vld [vmem:[%s10 + $0x58] sm:$0xff]
    %v489 = vld [vmem:[%s10 + $0x60] sm:$0xff]
    %v490 = vld [vmem:[%s10 + $0x68] sm:$0xff]
    %v491 = vld [vmem:[%s10 + $0x70] sm:$0xff]
    %v492 = vld [vmem:[%s10 + $0x78] sm:$0xff]
    %493 = vmatprep.subr.mxu0 0.0
    %494 = vmatpush1.msra.mxu0 %v492
    %495 = vmatprep.subr.mxu0 0.0
    %496 = vmatpush1.msra.mxu0 %v491
    %497 = vmatprep.subr.mxu0 0.0
    %498 = vmatpush1.msra.mxu0 %v490
    %499 = vmatprep.subr.mxu0 0.0
    %500 = vmatpush1.msra.mxu0 %v489
    %501 = vmatprep.subr.mxu0 0.0
    %502 = vmatpush1.msra.mxu0 %v488
    %503 = vmatprep.subr.mxu0 0.0
    %504 = vmatpush1.msra.mxu0 %v487
    %505 = vmatprep.subr.mxu0 0.0
    %506 = vmatpush1.msra.mxu0 %v486
    %507 = vmatprep.subr.mxu0 0.0
    %508 = vmatpush1.msra.mxu0 %v485
    %509 = vmatprep.subr.mxu0 0.0
    %510 = vmatpush1.msra.mxu0 %v484
    %511 = vmatprep.subr.mxu0 0.0
    %512 = vmatpush1.msra.mxu0 %v483
    %513 = vmatprep.subr.mxu0 0.0
    %514 = vmatpush1.msra.mxu0 %v482
    %515 = vmatprep.subr.mxu0 0.0
    %516 = vmatpush1.msra.mxu0 %v481
    %517 = vmatprep.subr.mxu0 0.0
    %518 = vmatpush1.msra.mxu0 %v480
    %519 = vmatprep.subr.mxu0 0.0
    %520 = vmatpush1.msra.mxu0 %v479
    %521 = vmatprep.subr.mxu0 0.0
    %522 = vmatpush1.msra.mxu0 %v478
    %523 = vmatprep.subr.mxu0 0.0
    %524 = vmatpush1.msra.mxu0 %v477
    %525 = vmatprep.subr.mxu0 0.0
    %526 = vmatpush2.msra.mxu0 0.0
    %527 = vmatprep.subr.mxu0 0.0
    %528 = vmatpush2.msra.mxu0 0.0
    %529 = vmatprep.subr.mxu0 0.0
    %530 = vmatpush2.msra.mxu0 0.0
    %531 = vmatprep.subr.mxu0 0.0
    %532 = vmatpush2.msra.mxu0 0.0
    %533 = vmatprep.subr.mxu0 0.0
    %534 = vmatpush2.msra.mxu0 0.0
    %535 = vmatprep.subr.mxu0 0.0
    %536 = vmatpush2.msra.mxu0 0.0
    %537 = vmatprep.subr.mxu0 0.0
    %538 = vmatpush2.msra.mxu0 0.0
    %539 = vmatprep.subr.mxu0 0.0
    %540 = vmatpush2.msra.mxu0 0.0
    %541 = vmatprep.subr.mxu0 0.0
    %542 = vmatpush2.msra.mxu0 0.0
    %543 = vmatprep.subr.mxu0 0.0
    %544 = vmatpush2.msra.mxu0 0.0
    %545 = vmatprep.subr.mxu0 0.0
    %546 = vmatpush2.msra.mxu0 0.0
    %547 = vmatprep.subr.mxu0 0.0
    %548 = vmatpush2.msra.mxu0 0.0
    %549 = vmatprep.subr.mxu0 0.0
    %550 = vmatpush2.msra.mxu0 0.0
    %551 = vmatprep.subr.mxu0 0.0
    %552 = vmatpush2.msra.mxu0 0.0
    %553 = vmatprep.subr.mxu0 0.0
    %554 = vmatpush2.msra.mxu0 0.0
    %555 = vmatprep.subr.mxu0 0.0
    %556 = vmatpush2.msra.mxu0 0.0
    %557 = vmatprep.mubr.f32.mxu0 0.0
    %558 = vmatmul.mubr.f32.gmra.mxu0 %v460
    %v559 = vpop.f32.mrf.mxu0
    %v560 = vadd.f32 0.0, %v559
    %v561 = vpop.f32.mrf.mxu0
    %562 = vdwg.mxu0
    %563 = vmatprep.subr.mxu0 0.0
    %564 = vmatpush1.msra.mxu0 %v476
    %565 = vmatprep.subr.mxu0 0.0
    %566 = vmatpush1.msra.mxu0 %v475
    %567 = vmatprep.subr.mxu0 0.0
    %568 = vmatpush1.msra.mxu0 %v474
    %569 = vmatprep.subr.mxu0 0.0
    %570 = vmatpush1.msra.mxu0 %v473
    %571 = vmatprep.subr.mxu0 0.0
    %572 = vmatpush1.msra.mxu0 %v472
    %573 = vmatprep.subr.mxu0 0.0
    %574 = vmatpush1.msra.mxu0 %v471
    %575 = vmatprep.subr.mxu0 0.0
    %576 = vmatpush1.msra.mxu0 %v470
    %577 = vmatprep.subr.mxu0 0.0
    %578 = vmatpush1.msra.mxu0 %v469
    %579 = vmatprep.subr.mxu0 0.0
    %580 = vmatpush1.msra.mxu0 %v468
    %581 = vmatprep.subr.mxu0 0.0
    %582 = vmatpush1.msra.mxu0 %v467
    %583 = vmatprep.subr.mxu0 0.0
    %584 = vmatpush1.msra.mxu0 %v466
    %585 = vmatprep.subr.mxu0 0.0
    %586 = vmatpush1.msra.mxu0 %v465
    %587 = vmatprep.subr.mxu0 0.0
    %588 = vmatpush1.msra.mxu0 %v464
    %589 = vmatprep.subr.mxu0 0.0
    %590 = vmatpush1.msra.mxu0 %v463
    %591 = vmatprep.subr.mxu0 0.0
    %592 = vmatpush1.msra.mxu0 %v462
    %593 = vmatprep.subr.mxu0 0.0
    %594 = vmatpush1.msra.mxu0 %v461
    %595 = vmatprep.subr.mxu0 0.0
    %596 = vmatpush2.msra.mxu0 0.0
    %597 = vmatprep.subr.mxu0 0.0
    %598 = vmatpush2.msra.mxu0 0.0
    %599 = vmatprep.subr.mxu0 0.0
    %600 = vmatpush2.msra.mxu0 0.0
    %601 = vmatprep.subr.mxu0 0.0
    %602 = vmatpush2.msra.mxu0 0.0
    %603 = vmatprep.subr.mxu0 0.0
    %604 = vmatpush2.msra.mxu0 0.0
    %605 = vmatprep.subr.mxu0 0.0
    %606 = vmatpush2.msra.mxu0 0.0
    %607 = vmatprep.subr.mxu0 0.0
    %608 = vmatpush2.msra.mxu0 0.0
    %609 = vmatprep.subr.mxu0 0.0
    %610 = vmatpush2.msra.mxu0 0.0
    %611 = vmatprep.subr.mxu0 0.0
    %612 = vmatpush2.msra.mxu0 0.0
    %613 = vmatprep.subr.mxu0 0.0
    %614 = vmatpush2.msra.mxu0 0.0
    %615 = vmatprep.subr.mxu0 0.0
    %616 = vmatpush2.msra.mxu0 0.0
    %617 = vmatprep.subr.mxu0 0.0
    %618 = vmatpush2.msra.mxu0 0.0
    %619 = vmatprep.subr.mxu0 0.0
    %620 = vmatpush2.msra.mxu0 0.0
    %621 = vmatprep.subr.mxu0 0.0
    %622 = vmatpush2.msra.mxu0 0.0
    %623 = vmatprep.subr.mxu0 0.0
    %624 = vmatpush2.msra.mxu0 0.0
    %625 = vmatprep.subr.mxu0 0.0
    %626 = vmatpush2.msra.mxu0 0.0
    %627 = vmatprep.mubr.f32.mxu0 0.0
    %628 = vmatmul.mubr.f32.gmra.mxu0 %v366
    %v629 = vpop.f32.mrf.mxu0
    %v630 = vadd.f32 %v560, %v629
    %v631 = vpop.f32.mrf.mxu0
    %632 = vdwg.mxu0
    %v633 = vld [vmem:[%s11] sm:$0x1]
    %v635 = vlaneseq
    %v636 = vshrl.u32 %v635, 7
    %v637 = vsub.s32 0, %v636
    %v638 = vrot.slane %v633, %v637
    %v640 = vadd.f32 %v630, %v638
    %vm641 = vcmask 64512
    %642 = vst.msk [vmem:[%s12] sm:$0xff] %vm641, %v640
    // Predicated region
    $region58: #{critic_forward.1} parent=1 // pred_check
      _
    $region59: #{critic_forward.1} parent=1 // pred_check_branch
      %644 = sbr.rel (0) target = $region61
    $region60: #{critic_forward.1} parent=1 // pred_region
      _
    $region61: #{critic_forward.1} parent=1 // pred_fallthru
      _
    // Predicated region
    $region62: #{critic_forward.1} parent=1 // pred_check
      _
    $region63: #{critic_forward.1} parent=1 // pred_check_branch
      %646 = sbr.rel (0) target = $region65
    $region64: #{critic_forward.1} parent=1 // pred_region
      _
    $region65: #{critic_forward.1} parent=1 // pred_fallthru
      _
    %647 = vsyncpa [#allocation3], 1
    %648 = vsyncpa [#allocation5], 1

</llo_original>
